<compile_context>
chip_gen: v7x
topology: tpu7x:2x2x1
jax: 0.10.0
libtpu: 0.0.40
codegen_flags: <defaults>
</compile_context>

<pallas_src>
import functools

import jax
import jax.numpy as jnp
from jax import lax
from jax.experimental import pallas as pl
from jax.experimental.pallas import tpu as pltpu


def _round_up(x, m):
    return ((x + m - 1) // m) * m


def attn_kernel(full_ref, last_ref, w1_ref, w2_ref, b12_ref,
                v_ref, vb_ref, out_ref, *, t_valid, mm_dtype):
    full = full_ref[...]          # (TB, Tp, Hp) f32
    last = last_ref[...]          # (TB, Hp)     f32
    w1 = w1_ref[...]              # (Hp, Op)
    w2 = w2_ref[...]              # (Hp, Op)
    b12 = b12_ref[...]            # (1, Op)  == b1 + b2 (folded in the wrapper)
    v = v_ref[...]                # (1, Op)

    tb, tp, hp = full.shape
    op = w1.shape[1]

    # ---- W1(last), both Linear biases already folded into one per-row add ---
    w1_last = jnp.dot(last.astype(mm_dtype), w1.astype(mm_dtype),
                      preferred_element_type=jnp.float32) + b12          # (TB, Op)

    # ---- W2(full): collapse (batch, time) into M -> one large MXU matmul ----
    w2_full = jnp.dot(full.reshape(tb * tp, hp).astype(mm_dtype),
                      w2.astype(mm_dtype),
                      preferred_element_type=jnp.float32)                # (TB*Tp, Op)
    w2_full = w2_full.reshape(tb, tp, op)

    # ---- additive-attention energies (tanh on the EUP) ----------------------
    s = jnp.tanh(w1_last[:, None, :] + w2_full)                          # (TB, Tp, Op)

    # ---- V(.): VPU multiply + lane reduce (avoid an N=1 MXU matvec); 2-D out.
    # vb is a constant shift of all scores; kept for exact fidelity (free add).
    score = jnp.sum(s * v[None, :, :], axis=-1) + vb_ref[0]              # (TB, Tp)

    if tp > t_valid:  # mask padded time steps before the softmax
        t_idx = lax.broadcasted_iota(jnp.int32, (tb, tp), 1)
        score = jnp.where(t_idx < t_valid, score, -1e30)

    # ---- numerically stable softmax over time (lane axis -> cheap reduce) ---
    m = jnp.max(score, axis=-1, keepdims=True)
    e = jnp.exp(score - m)
    denom = jnp.sum(e, axis=-1, keepdims=True)
    # exact reciprocal keeps the 1e-5 tolerance; approx=True is fine at ~1e-3.
    weights = e * pl.reciprocal(denom)                                   # (TB, Tp)

    # ---- context = sum_t weights * full, as a K=T contraction on the MXU ----
    ctx = lax.dot_general(weights[:, None, :], full,
                          dimension_numbers=(((2,), (1,)), ((0,), (0,))),
                          preferred_element_type=jnp.float32)            # (TB, 1, Hp)
    out_ref[...] = ctx[:, 0, :].astype(out_ref.dtype)


def attn_forward(full, last, params, *, use_bf16_matmul=False,
                 batch_tile_budget_bytes=2 << 20):
    """full: (B, T, H); last: (B, 1, H) or (B, H); returns (B, H)."""
    if last.ndim == 3:
        last = last[:, 0, :]
    B, T, H = full.shape
    O = params['w1'].shape[1]
    f32 = jnp.float32

    # ---- lane/sublane-dense padded sizes ------------------------------------
    Hp = _round_up(H, 128)
    Op = _round_up(O, 128)
    Tp = _round_up(T, 8)

    # batch tile: biggest multiple of 8 whose `full` slab fits the budget
    # (budget chosen well under the 16/32 MiB scoped-VMEM defaults per chip,
    # leaving room for the (TB, Tp, Op) tanh intermediate and double buffers).
    rows = max(8, batch_tile_budget_bytes // (Tp * Hp * 4))
    TB = max(8, min(512, (rows // 8) * 8))
    Bp = _round_up(max(B, 8), 8)
    TB = min(TB, Bp)
    Bp = _round_up(Bp, TB)

    # ---- pad once in the wrapper (zeros are exact no-ops for the math) ------
    fullp = jnp.zeros((Bp, Tp, Hp), f32).at[:B, :T, :H].set(full.astype(f32))
    lastp = jnp.zeros((Bp, Hp), f32).at[:B, :H].set(last.astype(f32))
    w1p = jnp.zeros((Hp, Op), f32).at[:H, :O].set(params['w1'].astype(f32))
    w2p = jnp.zeros((Hp, Op), f32).at[:H, :O].set(params['w2'].astype(f32))
    b12p = (jnp.zeros((1, Op), f32)
            .at[:, :O].set((params['b1'] + params['b2']).reshape(1, O).astype(f32)))
    vp = jnp.zeros((1, Op), f32).at[:, :O].set(params['v'].reshape(1, O).astype(f32))
    vb = params['vb'].reshape((1,)).astype(f32)

    mm_dtype = jnp.bfloat16 if use_bf16_matmul else jnp.float32
    kernel = functools.partial(attn_kernel, t_valid=T, mm_dtype=mm_dtype)

    flops = 2 * Bp * Op * (Tp * Hp + Hp) + 2 * Bp * Tp * Hp + 4 * Bp * Tp * Op
    transcendentals = Bp * Tp * (Op + 1)
    bytes_accessed = 4 * (fullp.size + lastp.size + 2 * Hp * Op + 2 * Op + Bp * Hp)

    out_p = pl.pallas_call(
        kernel,
        out_shape=jax.ShapeDtypeStruct((Bp, Hp), f32),
        grid=(Bp // TB,),
        in_specs=[
            pl.BlockSpec((TB, Tp, Hp), lambda b: (b, 0, 0)),    # full
            pl.BlockSpec((TB, Hp), lambda b: (b, 0)),           # last
            pl.BlockSpec((Hp, Op), lambda b: (0, 0)),           # W1 (resident)
            pl.BlockSpec((Hp, Op), lambda b: (0, 0)),           # W2 (resident)
            pl.BlockSpec((1, Op), lambda b: (0, 0)),            # b1 + b2
            pl.BlockSpec((1, Op), lambda b: (0, 0)),            # V weight (row)
            pl.BlockSpec(memory_space=pltpu.MemorySpace.SMEM),  # V bias scalar
        ],
        out_specs=pl.BlockSpec((TB, Hp), lambda b: (b, 0)),
        compiler_params=pltpu.CompilerParams(
            dimension_semantics=("parallel",),
            vmem_limit_bytes=32 * 1024 * 1024),
        cost_estimate=pl.CostEstimate(flops=flops,
                                      transcendentals=transcendentals,
                                      bytes_accessed=bytes_accessed),
    )(fullp, lastp, w1p, w2p, b12p, vp, vb)

    # TODO(synk): for very long T, add an inner "arbitrary" T grid axis with a
    # flash-style online softmax so per-step VMEM is independent of T.
    return out_p[:B, :H]


def init_params(key, in_shape, out_shape):
    """Deterministic PyTorch-Linear-style init; weights stored as (in, out)."""
    k1, k2, k3, k4, k5, k6 = jax.random.split(key, 6)
    bound = 1.0 / (in_shape ** 0.5)
    u = lambda k, shp: jax.random.uniform(k, shp, jnp.float32, -bound, bound)
    return {
        'w1': u(k1, (in_shape, out_shape)),
        'b1': u(k2, (1, out_shape)),
        'w2': u(k3, (in_shape, out_shape)),
        'b2': u(k4, (1, out_shape)),
        'v':  u(k5, (out_shape, 1)),
        'vb': u(k6, (1,)),
    }


def attn_reference(full, last, params):
    """Pure-JAX reference mirroring the PyTorch forward."""
    if last.ndim == 2:
        last = last[:, None, :]
    w1l = last @ params['w1'] + params['b1']                    # (B, 1, O)
    w2f = full @ params['w2'] + params['b2']                    # (B, T, O)
    score = jnp.tanh(w1l + w2f) @ params['v'] + params['vb']    # (B, T, 1)
    w = jax.nn.softmax(score, axis=1)
    return jnp.sum(w * full, axis=1)                            # (B, H)


if __name__ == "__main__":
    B, T, H = 2, 8, 32          # batch, seq, hidden (in_shape == out_shape == H)
    key = jax.random.PRNGKey(0)
    kf, kl, kp = jax.random.split(key, 3)
    full = jax.random.normal(kf, (B, T, H), jnp.float32)
    last = jax.random.normal(kl, (B, 1, H), jnp.float32)
    params = init_params(kp, H, H)

    out = attn_forward(full, last, params)
    out = jax.block_until_ready(out)

    ref = attn_reference(full, last, params)
    assert out.shape == (B, H)
    assert jnp.allclose(out, ref, atol=1e-5, rtol=1e-5)
    print("KERNEL_OK")
</pallas_src>

<mosaic_0001>
module attributes {stable_mosaic.version = 11 : i64} {
  func.func @attn_kernel(%arg0: i32, %arg1: memref<8x8x128xf32, #tpu.memory_space<vmem>>, %arg2: memref<8x128xf32, #tpu.memory_space<vmem>>, %arg3: memref<128x128xf32, #tpu.memory_space<vmem>>, %arg4: memref<128x128xf32, #tpu.memory_space<vmem>>, %arg5: memref<1x128xf32, #tpu.memory_space<vmem>>, %arg6: memref<1x128xf32, #tpu.memory_space<vmem>>, %arg7: memref<1xf32, #tpu.memory_space<smem>>, %arg8: memref<8x128xf32, #tpu.memory_space<vmem>>) attributes {dimension_semantics = [#tpu.dimension_semantics<parallel>], iteration_bounds = array<i64: 1>, scalar_prefetch = 0 : i64, scratch_operands = 0 : i64, tpu.core_type = #tpu.core_type<tc>, window_params = [{transform_indices = @transform_0, window_bounds = array<i64: 8, 8, 128>}, {transform_indices = @transform_1, window_bounds = array<i64: 8, 128>}, {pipeline_mode = #tpu.pipeline_mode<synchronous>, transform_indices = @transform_2, window_bounds = array<i64: 128, 128>}, {pipeline_mode = #tpu.pipeline_mode<synchronous>, transform_indices = @transform_3, window_bounds = array<i64: 128, 128>}, {pipeline_mode = #tpu.pipeline_mode<synchronous>, transform_indices = @transform_4, window_bounds = array<i64: 1, 128>}, {pipeline_mode = #tpu.pipeline_mode<synchronous>, transform_indices = @transform_5, window_bounds = array<i64: 1, 128>}, {transform_indices = @transform_6, window_bounds = array<i64: 1>}, {transform_indices = @transform_7, window_bounds = array<i64: 8, 128>}]} {
    %c0 = arith.constant 0 : index
    %c0_0 = arith.constant 0 : index
    %c0_1 = arith.constant 0 : index
    %0 = vector.load %arg1[%c0, %c0_0, %c0_1] : memref<8x8x128xf32, #tpu.memory_space<vmem>>, vector<8x8x128xf32>
    %c0_2 = arith.constant 0 : index
    %c0_3 = arith.constant 0 : index
    %1 = vector.load %arg2[%c0_2, %c0_3] : memref<8x128xf32, #tpu.memory_space<vmem>>, vector<8x128xf32>
    %c0_4 = arith.constant 0 : index
    %c0_5 = arith.constant 0 : index
    %2 = vector.load %arg3[%c0_4, %c0_5] : memref<128x128xf32, #tpu.memory_space<vmem>>, vector<128x128xf32>
    %c0_6 = arith.constant 0 : index
    %c0_7 = arith.constant 0 : index
    %3 = vector.load %arg4[%c0_6, %c0_7] : memref<128x128xf32, #tpu.memory_space<vmem>>, vector<128x128xf32>
    %c0_8 = arith.constant 0 : index
    %c0_9 = arith.constant 0 : index
    %4 = vector.load %arg5[%c0_8, %c0_9] : memref<1x128xf32, #tpu.memory_space<vmem>>, vector<1x128xf32>
    %c0_10 = arith.constant 0 : index
    %c0_11 = arith.constant 0 : index
    %5 = vector.load %arg6[%c0_10, %c0_11] : memref<1x128xf32, #tpu.memory_space<vmem>>, vector<1x128xf32>
    %cst = arith.constant dense<0.000000e+00> : vector<8x128xf32>
    %6 = tpu.matmul %1, %2, %cst {dimension_numbers = #tpu.dot_dimension_numbers<[1], [0], [0], [1], [0, 0, 1, 1], [], []>} : vector<8x128xf32>, vector<128x128xf32>, vector<8x128xf32> -> vector<8x128xf32>
    %7 = vector.broadcast %4 : vector<1x128xf32> to vector<8x128xf32>
    %8 = arith.addf %6, %7 : vector<8x128xf32>
    %9 = vector.shape_cast %0 : vector<8x8x128xf32> to vector<64x128xf32>
    %cst_12 = arith.constant dense<0.000000e+00> : vector<64x128xf32>
    %10 = tpu.matmul %9, %3, %cst_12 {dimension_numbers = #tpu.dot_dimension_numbers<[1], [0], [0], [1], [0, 0, 1, 1], [], []>} : vector<64x128xf32>, vector<128x128xf32>, vector<64x128xf32> -> vector<64x128xf32>
    %11 = vector.shape_cast %10 : vector<64x128xf32> to vector<8x8x128xf32>
    %12 = vector.shape_cast %8 : vector<8x128xf32> to vector<8x1x128xf32>
    %13 = vector.broadcast %12 : vector<8x1x128xf32> to vector<8x8x128xf32>
    %14 = arith.addf %13, %11 : vector<8x8x128xf32>
    %15 = math.tanh %14 : vector<8x8x128xf32>
    %16 = vector.shape_cast %5 : vector<1x128xf32> to vector<1x1x128xf32>
    %17 = vector.broadcast %16 : vector<1x1x128xf32> to vector<8x8x128xf32>
    %18 = arith.mulf %15, %17 : vector<8x8x128xf32>
    %cst_13 = arith.constant dense<0.000000e+00> : vector<8x8xf32>
    %19 = vector.multi_reduction <add>, %18, %cst_13 [2] : vector<8x8x128xf32> to vector<8x8xf32>
    %c0_14 = arith.constant 0 : index
    %20 = memref.load %arg7[%c0_14] : memref<1xf32, #tpu.memory_space<smem>>
    %21 = vector.broadcast %20 : f32 to vector<8x8xf32>
    %22 = arith.addf %19, %21 : vector<8x8xf32>
    %cst_15 = arith.constant dense<0xFF800000> : vector<8xf32>
    %23 = vector.multi_reduction <maximumf>, %22, %cst_15 [1] : vector<8x8xf32> to vector<8xf32>
    %24 = vector.shape_cast %23 : vector<8xf32> to vector<8x1xf32>
    %25 = vector.broadcast %24 : vector<8x1xf32> to vector<8x8xf32>
    %26 = arith.subf %22, %25 : vector<8x8xf32>
    %27 = math.exp %26 : vector<8x8xf32>
    %cst_16 = arith.constant dense<0.000000e+00> : vector<8xf32>
    %28 = vector.multi_reduction <add>, %27, %cst_16 [1] : vector<8x8xf32> to vector<8xf32>
    %29 = vector.shape_cast %28 : vector<8xf32> to vector<8x1xf32>
    %30 = tpu.reciprocal %29 : vector<8x1xf32> -> vector<8x1xf32>
    %31 = vector.broadcast %30 : vector<8x1xf32> to vector<8x8xf32>
    %32 = arith.mulf %27, %31 : vector<8x8xf32>
    %33 = vector.shape_cast %32 : vector<8x8xf32> to vector<8x1x8xf32>
    %cst_17 = arith.constant dense<0.000000e+00> : vector<8x1x128xf32>
    %34 = tpu.matmul %33, %0, %cst_17 {dimension_numbers = #tpu.dot_dimension_numbers<[2], [1], [1], [2], [0, 0, 0, 1, 1, 2], [0], [0]>} : vector<8x1x8xf32>, vector<8x8x128xf32>, vector<8x1x128xf32> -> vector<8x1x128xf32>
    %35 = vector.shape_cast %34 : vector<8x1x128xf32> to vector<8x128xf32>
    %c0_18 = arith.constant 0 : index
    %c0_19 = arith.constant 0 : index
    %36 = vector.load %arg8[%c0_18, %c0_19] : memref<8x128xf32, #tpu.memory_space<vmem>>, vector<8x128xf32>
    tpu.vector_store %arg8[%c0_18, %c0_19], %35 {strides = array<i32>} : memref<8x128xf32, #tpu.memory_space<vmem>>, vector<8x128xf32>,
    return
  }
  func.func @transform_0(%arg0: i32) -> (i32, i32, i32) {
    %c0_i32 = arith.constant 0 : i32
    %c0_i32_0 = arith.constant 0 : i32
    %c0_i32_1 = arith.constant 0 : i32
    return %arg0, %c0_i32, %c0_i32_0 : i32, i32, i32
  }
  func.func @transform_1(%arg0: i32) -> (i32, i32) {
    %c0_i32 = arith.constant 0 : i32
    %c0_i32_0 = arith.constant 0 : i32
    return %arg0, %c0_i32 : i32, i32
  }
  func.func @transform_2(%arg0: i32) -> (i32, i32) {
    %c0_i32 = arith.constant 0 : i32
    %c0_i32_0 = arith.constant 0 : i32
    %c0_i32_1 = arith.constant 0 : i32
    return %c0_i32, %c0_i32_0 : i32, i32
  }
  func.func @transform_3(%arg0: i32) -> (i32, i32) {
    %c0_i32 = arith.constant 0 : i32
    %c0_i32_0 = arith.constant 0 : i32
    %c0_i32_1 = arith.constant 0 : i32
    return %c0_i32, %c0_i32_0 : i32, i32
  }
  func.func @transform_4(%arg0: i32) -> (i32, i32) {
    %c0_i32 = arith.constant 0 : i32
    %c0_i32_0 = arith.constant 0 : i32
    %c0_i32_1 = arith.constant 0 : i32
    return %c0_i32, %c0_i32_0 : i32, i32
  }
  func.func @transform_5(%arg0: i32) -> (i32, i32) {
    %c0_i32 = arith.constant 0 : i32
    %c0_i32_0 = arith.constant 0 : i32
    %c0_i32_1 = arith.constant 0 : i32
    return %c0_i32, %c0_i32_0 : i32, i32
  }
  func.func @transform_6(%arg0: i32) -> i32 {
    %c0_i32 = arith.constant 0 : i32
    %c0_i32_0 = arith.constant 0 : i32
    return %c0_i32 : i32
  }
  func.func @transform_7(%arg0: i32) -> (i32, i32) {
    %c0_i32 = arith.constant 0 : i32
    %c0_i32_0 = arith.constant 0 : i32
    return %arg0, %c0_i32 : i32, i32
  }
}

</mosaic_0001>

<llo_original>
// kernel: tpu_custom_call.1
$region0: #{tpu_custom_call.1}
  #allocation0 [shape = 'u32[]', space=smem, size = 0x4, offset = 0x4, fixed_abs, tag = 'smem constant byte address 0x4 - core index']
  #allocation1 [shape = 'u32[144,128]{1,0:T(1,128)}', space=vmem, size = 0x12000, scoped, tag = 'internal scratch']
  #allocation2 [shape = 'f32[1]{0:T(128)S(6)}', space=smem, size = 0x200, scoped, tag = 'scoped memory for tpu_custom_call.1']
  %s0 = inlined_call_operand.hbm [shape: f32[8,8,128], index: 0, kind: input, shape index: {}]
  %s1 = inlined_call_operand.hbm [shape: f32[8,128], index: 1, kind: input, shape index: {}]
  %s2 = inlined_call_operand.hbm [shape: f32[128,128], index: 2, kind: input, shape index: {}]
  %s3 = inlined_call_operand.hbm [shape: f32[128,128], index: 3, kind: input, shape index: {}]
  %s4 = inlined_call_operand.vmem [shape: f32[1,128], index: 4, kind: input, shape index: {}]
  %s5 = inlined_call_operand.vmem [shape: f32[1,128], index: 5, kind: input, shape index: {}]
  %s6 = inlined_call_operand.<no memory space> [shape: f32[1], index: 6, kind: input, shape index: {}]
  %s7 = inlined_call_operand.hbm [shape: f32[8,128], index: 7, kind: output, shape index: {}]
  %s8 = sld [smem:[#allocation0]]
  $region54: #{tpu_custom_call.1} parent=0
    _
  %s10 = ssub.s32 1, %s8
  %s11 = scalar_select 0, %s10, %s8
  %12 = sst [smem:[#allocation2]] %s6
  $region1: #{tpu_custom_call.1} parent=0
    #allocation3 [shape = 'u8[32768]{0}', space=vmem, size = 0x8000, scoped, tag = 'input window, operand 0, single buffered']
    #allocation4 [shape = 's32[1]{0}', space=sflag, size = 0x4, scoped, tag = 'scoped memory for tpu_custom_call.1']
    #allocation5 [shape = 's32[1]{0}', space=sflag, size = 0x4, scoped, tag = 'scoped memory for tpu_custom_call.1']
    #allocation6 [shape = 'u8[4096]{0}', space=vmem, size = 0x1000, scoped, tag = 'input window, operand 1, single buffered']
    #allocation7 [shape = 's32[1]{0}', space=sflag, size = 0x4, scoped, tag = 'scoped memory for tpu_custom_call.1']
    #allocation8 [shape = 'u8[65536]{0}', space=vmem, size = 0x10000, scoped, tag = 'input window, operand 2, single buffered']
    #allocation9 [shape = 'u8[65536]{0}', space=vmem, size = 0x10000, scoped, tag = 'input window, operand 3, single buffered']
    #allocation10 [shape = 's32[1]{0}', space=sflag, size = 0x4, scoped, tag = 'scoped memory for tpu_custom_call.1']
    #allocation11 [shape = 'u8[4096]{0}', space=vmem, size = 0x1000, scoped, tag = 'output window, operand 0, single buffered']
    %13 = vsyncpa [#allocation4], 0
    %14 = vsyncpa [#allocation7], 0
    %15 = vsyncpa [#allocation10], 0
    %16 = vsyncpa [#allocation5], 0
    // Predicated region
    $region2: #{tpu_custom_call.1} parent=1 // pred_check
      _
    $region3: #{tpu_custom_call.1} parent=1 // pred_check_branch
      %18 = sbr.rel (0) target = $region5
    $region4: #{tpu_custom_call.1} parent=1 // pred_region
      %s20 = ssub.s32 1024, 1024
      %21 = vsyncadd [#allocation4], %s20
      %s22 = sshll.u32 [#allocation3], 4
      %s23 = int_to_ptr.vmem [resolvable:$true] %s22
      %28 = dma.hbm_to_vmem [thread:$0]  %s0, 1024, %s23, [#allocation4], 128, 128, 8
    $region5: #{tpu_custom_call.1} parent=1 // pred_fallthru
      _
    // Predicated region
    $region6: #{tpu_custom_call.1} parent=1 // pred_check
      _
    $region7: #{tpu_custom_call.1} parent=1 // pred_check_branch
      %30 = sbr.rel (0) target = $region9
    $region8: #{tpu_custom_call.1} parent=1 // pred_region
      %s32 = ssub.s32 128, 128
      %33 = vsyncadd [#allocation7], %s32
      %s35 = sshll.u32 [#allocation6], 4
      %s36 = int_to_ptr.vmem [resolvable:$true] %s35
      %38 = dma.hbm_to_vmem [thread:$0]  %s1, 128, %s36, [#allocation7]
    $region9: #{tpu_custom_call.1} parent=1 // pred_fallthru
      _
    // Predicated region
    $region10: #{tpu_custom_call.1} parent=1 // pred_check
      _
    $region11: #{tpu_custom_call.1} parent=1 // pred_check_branch
      %40 = sbr.rel (0) target = $region13
    $region12: #{tpu_custom_call.1} parent=1 // pred_region
      %s42 = ssub.s32 2048, 2048
      %43 = vsyncadd [#allocation7], %s42
      %s44 = sshll.u32 [#allocation8], 4
      %s45 = int_to_ptr.vmem [resolvable:$true] %s44
      %50 = dma.hbm_to_vmem [thread:$0]  %s2, 2048, %s45, [#allocation7], 128, 128, 8
    $region13: #{tpu_custom_call.1} parent=1 // pred_fallthru
      _
    // Predicated region
    $region14: #{tpu_custom_call.1} parent=1 // pred_check
      _
    $region15: #{tpu_custom_call.1} parent=1 // pred_check_branch
      %52 = sbr.rel (0) target = $region17
    $region16: #{tpu_custom_call.1} parent=1 // pred_region
      %s54 = ssub.s32 2048, 2048
      %55 = vsyncadd [#allocation10], %s54
      %s56 = sshll.u32 [#allocation9], 4
      %s57 = int_to_ptr.vmem [resolvable:$true] %s56
      %62 = dma.hbm_to_vmem [thread:$0]  %s3, 2048, %s57, [#allocation10], 128, 128, 8
    $region17: #{tpu_custom_call.1} parent=1 // pred_fallthru
      _
    // Predicated region
    $region18: #{tpu_custom_call.1} parent=1 // pred_check
      _
    $region19: #{tpu_custom_call.1} parent=1 // pred_check_branch
      %64 = sbr.rel (0) target = $region21
    $region20: #{tpu_custom_call.1} parent=1 // pred_region
      _
    $region21: #{tpu_custom_call.1} parent=1 // pred_fallthru
      _
    // Predicated region
    $region22: #{tpu_custom_call.1} parent=1 // pred_check
      _
    $region23: #{tpu_custom_call.1} parent=1 // pred_check_branch
      %66 = sbr.rel (0) target = $region25
    $region24: #{tpu_custom_call.1} parent=1 // pred_region
      _
    $region25: #{tpu_custom_call.1} parent=1 // pred_fallthru
      _
    // Predicated region
    $region26: #{tpu_custom_call.1} parent=1 // pred_check
      _
    $region27: #{tpu_custom_call.1} parent=1 // pred_check_branch
      %68 = sbr.rel (0) target = $region29
    $region28: #{tpu_custom_call.1} parent=1 // pred_region
      _
    $region29: #{tpu_custom_call.1} parent=1 // pred_fallthru
      _
    // Predicated region
    $region30: #{tpu_custom_call.1} parent=1 // pred_check
      _
    $region31: #{tpu_custom_call.1} parent=1 // pred_check_branch
      %70 = sbr.rel (0) target = $region33
    $region32: #{tpu_custom_call.1} parent=1 // pred_region
      %71 = dma.done [#allocation4], 1024
    $region33: #{tpu_custom_call.1} parent=1 // pred_fallthru
      _
    // Predicated region
    $region34: #{tpu_custom_call.1} parent=1 // pred_check
      _
    $region35: #{tpu_custom_call.1} parent=1 // pred_check_branch
      %73 = sbr.rel (0) target = $region37
    $region36: #{tpu_custom_call.1} parent=1 // pred_region
      %74 = dma.done [#allocation7], 128
    $region37: #{tpu_custom_call.1} parent=1 // pred_fallthru
      _
    // Predicated region
    $region38: #{tpu_custom_call.1} parent=1 // pred_check
      _
    $region39: #{tpu_custom_call.1} parent=1 // pred_check_branch
      %76 = sbr.rel (0) target = $region41
    $region40: #{tpu_custom_call.1} parent=1 // pred_region
      %77 = dma.done [#allocation7], 2048
    $region41: #{tpu_custom_call.1} parent=1 // pred_fallthru
      _
    // Predicated region
    $region42: #{tpu_custom_call.1} parent=1 // pred_check
      _
    $region43: #{tpu_custom_call.1} parent=1 // pred_check_branch
      %79 = sbr.rel (0) target = $region45
    $region44: #{tpu_custom_call.1} parent=1 // pred_region
      %80 = dma.done [#allocation10], 2048
    $region45: #{tpu_custom_call.1} parent=1 // pred_fallthru
      _
    %v81 = vld [vmem:[#allocation3] sm:$0xff]
    %v82 = vld [vmem:[#allocation3 + $0x8] sm:$0xff]
    %v83 = vld [vmem:[#allocation3 + $0x10] sm:$0xff]
    %v84 = vld [vmem:[#allocation3 + $0x18] sm:$0xff]
    %v85 = vld [vmem:[#allocation3 + $0x20] sm:$0xff]
    %v86 = vld [vmem:[#allocation3 + $0x28] sm:$0xff]
    %v87 = vld [vmem:[#allocation3 + $0x30] sm:$0xff]
    %v88 = vld [vmem:[#allocation3 + $0x38] sm:$0xff]
    %v89 = vld [vmem:[#allocation6] sm:$0xff]
    %v90 = vld [vmem:[#allocation8] sm:$0xff]
    %v91 = vld [vmem:[#allocation8 + $0x8] sm:$0xff]
    %v92 = vld [vmem:[#allocation8 + $0x10] sm:$0xff]
    %v93 = vld [vmem:[#allocation8 + $0x18] sm:$0xff]
    %v94 = vld [vmem:[#allocation8 + $0x20] sm:$0xff]
    %v95 = vld [vmem:[#allocation8 + $0x28] sm:$0xff]
    %v96 = vld [vmem:[#allocation8 + $0x30] sm:$0xff]
    %v97 = vld [vmem:[#allocation8 + $0x38] sm:$0xff]
    %v98 = vld [vmem:[#allocation8 + $0x40] sm:$0xff]
    %v99 = vld [vmem:[#allocation8 + $0x48] sm:$0xff]
    %v100 = vld [vmem:[#allocation8 + $0x50] sm:$0xff]
    %v101 = vld [vmem:[#allocation8 + $0x58] sm:$0xff]
    %v102 = vld [vmem:[#allocation8 + $0x60] sm:$0xff]
    %v103 = vld [vmem:[#allocation8 + $0x68] sm:$0xff]
    %v104 = vld [vmem:[#allocation8 + $0x70] sm:$0xff]
    %v105 = vld [vmem:[#allocation8 + $0x78] sm:$0xff]
    %v106 = vld [vmem:[#allocation9] sm:$0xff]
    %v107 = vld [vmem:[#allocation9 + $0x8] sm:$0xff]
    %v108 = vld [vmem:[#allocation9 + $0x10] sm:$0xff]
    %v109 = vld [vmem:[#allocation9 + $0x18] sm:$0xff]
    %v110 = vld [vmem:[#allocation9 + $0x20] sm:$0xff]
    %v111 = vld [vmem:[#allocation9 + $0x28] sm:$0xff]
    %v112 = vld [vmem:[#allocation9 + $0x30] sm:$0xff]
    %v113 = vld [vmem:[#allocation9 + $0x38] sm:$0xff]
    %v114 = vld [vmem:[#allocation9 + $0x40] sm:$0xff]
    %v115 = vld [vmem:[#allocation9 + $0x48] sm:$0xff]
    %v116 = vld [vmem:[#allocation9 + $0x50] sm:$0xff]
    %v117 = vld [vmem:[#allocation9 + $0x58] sm:$0xff]
    %v118 = vld [vmem:[#allocation9 + $0x60] sm:$0xff]
    %v119 = vld [vmem:[#allocation9 + $0x68] sm:$0xff]
    %v120 = vld [vmem:[#allocation9 + $0x70] sm:$0xff]
    %v121 = vld [vmem:[#allocation9 + $0x78] sm:$0xff]
    %v122 = vld [vmem:[%s4] sm:$0x1]
    %v123 = vld [vmem:[%s5] sm:$0x1]
    %v125 = vlaneseq
    %v126 = vshrl.u32 %v125, 7
    %v127 = vsub.s32 0, %v126
    %v128 = vrot.slane %v122, %v127
    %130 = vmatprep.subr.mxu0 0.0
    %131 = vmatpush1.msra.mxu0 %v90
    %132 = vmatprep.subr.mxu0 0.0
    %133 = vmatpush1.msra.mxu0 %v91
    %134 = vmatprep.subr.mxu0 0.0
    %135 = vmatpush1.msra.mxu0 %v92
    %136 = vmatprep.subr.mxu0 0.0
    %137 = vmatpush1.msra.mxu0 %v93
    %138 = vmatprep.subr.mxu0 0.0
    %139 = vmatpush1.msra.mxu0 %v94
    %140 = vmatprep.subr.mxu0 0.0
    %141 = vmatpush1.msra.mxu0 %v95
    %142 = vmatprep.subr.mxu0 0.0
    %143 = vmatpush1.msra.mxu0 %v96
    %144 = vmatprep.subr.mxu0 0.0
    %145 = vmatpush1.msra.mxu0 %v97
    %146 = vmatprep.subr.mxu0 0.0
    %147 = vmatpush1.msra.mxu0 %v98
    %148 = vmatprep.subr.mxu0 0.0
    %149 = vmatpush1.msra.mxu0 %v99
    %150 = vmatprep.subr.mxu0 0.0
    %151 = vmatpush1.msra.mxu0 %v100
    %152 = vmatprep.subr.mxu0 0.0
    %153 = vmatpush1.msra.mxu0 %v101
    %154 = vmatprep.subr.mxu0 0.0
    %155 = vmatpush1.msra.mxu0 %v102
    %156 = vmatprep.subr.mxu0 0.0
    %157 = vmatpush1.msra.mxu0 %v103
    %158 = vmatprep.subr.mxu0 0.0
    %159 = vmatpush1.msra.mxu0 %v104
    %160 = vmatprep.subr.mxu0 0.0
    %161 = vmatpush1.msra.mxu0 %v105
    %162 = vmatprep.subr.mxu0 0.0
    %163 = vmatpush1.msra.mxu0 0.0
    %164 = vmatprep.subr.mxu0 0.0
    %165 = vmatpush1.msra.mxu0 0.0
    %166 = vmatprep.subr.mxu0 0.0
    %167 = vmatpush1.msra.mxu0 0.0
    %168 = vmatprep.subr.mxu0 0.0
    %169 = vmatpush1.msra.mxu0 0.0
    %170 = vmatprep.subr.mxu0 0.0
    %171 = vmatpush1.msra.mxu0 0.0
    %172 = vmatprep.subr.mxu0 0.0
    %173 = vmatpush1.msra.mxu0 0.0
    %174 = vmatprep.subr.mxu0 0.0
    %175 = vmatpush1.msra.mxu0 0.0
    %176 = vmatprep.subr.mxu0 0.0
    %177 = vmatpush1.msra.mxu0 0.0
    %178 = vmatprep.subr.mxu0 0.0
    %179 = vmatpush1.msra.mxu0 0.0
    %180 = vmatprep.subr.mxu0 0.0
    %181 = vmatpush1.msra.mxu0 0.0
    %182 = vmatprep.subr.mxu0 0.0
    %183 = vmatpush1.msra.mxu0 0.0
    %184 = vmatprep.subr.mxu0 0.0
    %185 = vmatpush1.msra.mxu0 0.0
    %186 = vmatprep.subr.mxu0 0.0
    %187 = vmatpush1.msra.mxu0 0.0
    %188 = vmatprep.subr.mxu0 0.0
    %189 = vmatpush1.msra.mxu0 0.0
    %190 = vmatprep.subr.mxu0 0.0
    %191 = vmatpush1.msra.mxu0 0.0
    %192 = vmatprep.subr.mxu0 0.0
    %193 = vmatpush1.msra.mxu0 0.0
    %194 = vmatprep.mubr.f32.mxu0 0.0
    %195 = vmatmul.mubr.f32.gmra.mrb[0].mxu0 %v89
    %v196 = vpop.f32.mrb[0].mxu0
    %v197 = vadd.f32 %v128, %v196
    %v198 = vpop.f32.mrb[0].mxu0
    %199 = vdwg.mxu0
    %200 = vmatprep.subr.mxu0 0.0
    %201 = vmatpush1.msra.mxu0 %v106
    %202 = vmatprep.subr.mxu0 0.0
    %203 = vmatpush1.msra.mxu0 %v107
    %204 = vmatprep.subr.mxu0 0.0
    %205 = vmatpush1.msra.mxu0 %v108
    %206 = vmatprep.subr.mxu0 0.0
    %207 = vmatpush1.msra.mxu0 %v109
    %208 = vmatprep.subr.mxu0 0.0
    %209 = vmatpush1.msra.mxu0 %v110
    %210 = vmatprep.subr.mxu0 0.0
    %211 = vmatpush1.msra.mxu0 %v111
    %212 = vmatprep.subr.mxu0 0.0
    %213 = vmatpush1.msra.mxu0 %v112
    %214 = vmatprep.subr.mxu0 0.0
    %215 = vmatpush1.msra.mxu0 %v113
    %216 = vmatprep.subr.mxu0 0.0
    %217 = vmatpush1.msra.mxu0 %v114
    %218 = vmatprep.subr.mxu0 0.0
    %219 = vmatpush1.msra.mxu0 %v115
    %220 = vmatprep.subr.mxu0 0.0
    %221 = vmatpush1.msra.mxu0 %v116
    %222 = vmatprep.subr.mxu0 0.0
    %223 = vmatpush1.msra.mxu0 %v117
    %224 = vmatprep.subr.mxu0 0.0
    %225 = vmatpush1.msra.mxu0 %v118
    %226 = vmatprep.subr.mxu0 0.0
    %227 = vmatpush1.msra.mxu0 %v119
    %228 = vmatprep.subr.mxu0 0.0
    %229 = vmatpush1.msra.mxu0 %v120
    %230 = vmatprep.subr.mxu0 0.0
    %231 = vmatpush1.msra.mxu0 %v121
    %232 = vmatprep.subr.mxu0 0.0
    %233 = vmatpush1.msra.mxu0 0.0
    %234 = vmatprep.subr.mxu0 0.0
    %235 = vmatpush1.msra.mxu0 0.0
    %236 = vmatprep.subr.mxu0 0.0
    %237 = vmatpush1.msra.mxu0 0.0
    %238 = vmatprep.subr.mxu0 0.0
    %239 = vmatpush1.msra.mxu0 0.0
    %240 = vmatprep.subr.mxu0 0.0
    %241 = vmatpush1.msra.mxu0 0.0
    %242 = vmatprep.subr.mxu0 0.0
    %243 = vmatpush1.msra.mxu0 0.0
    %244 = vmatprep.subr.mxu0 0.0
    %245 = vmatpush1.msra.mxu0 0.0
    %246 = vmatprep.subr.mxu0 0.0
    %247 = vmatpush1.msra.mxu0 0.0
    %248 = vmatprep.subr.mxu0 0.0
    %249 = vmatpush1.msra.mxu0 0.0
    %250 = vmatprep.subr.mxu0 0.0
    %251 = vmatpush1.msra.mxu0 0.0
    %252 = vmatprep.subr.mxu0 0.0
    %253 = vmatpush1.msra.mxu0 0.0
    %254 = vmatprep.subr.mxu0 0.0
    %255 = vmatpush1.msra.mxu0 0.0
    %256 = vmatprep.subr.mxu0 0.0
    %257 = vmatpush1.msra.mxu0 0.0
    %258 = vmatprep.subr.mxu0 0.0
    %259 = vmatpush1.msra.mxu0 0.0
    %260 = vmatprep.subr.mxu0 0.0
    %261 = vmatpush1.msra.mxu0 0.0
    %262 = vmatprep.subr.mxu0 0.0
    %263 = vmatpush1.msra.mxu0 0.0
    %264 = vmatprep.mubr.f32.mxu0 0.0
    %265 = vmatmul.mubr.f32.gmra.mrb[0].mxu0 %v81
    %v266 = vpop.f32.mrb[0].mxu0
    %v267 = vadd.f32 0.0, %v266
    %v268 = vpop.f32.mrb[0].mxu0
    %269 = vmatprep.mubr.f32.mxu0 0.0
    %270 = vmatmul.mubr.f32.gmra.mrb[0].mxu0 %v82
    %v271 = vpop.f32.mrb[0].mxu0
    %v272 = vadd.f32 0.0, %v271
    %v273 = vpop.f32.mrb[0].mxu0
    %274 = vmatprep.mubr.f32.mxu0 0.0
    %275 = vmatmul.mubr.f32.gmra.mrb[0].mxu0 %v83
    %v276 = vpop.f32.mrb[0].mxu0
    %v277 = vadd.f32 0.0, %v276
    %v278 = vpop.f32.mrb[0].mxu0
    %279 = vmatprep.mubr.f32.mxu0 0.0
    %280 = vmatmul.mubr.f32.gmra.mrb[0].mxu0 %v84
    %v281 = vpop.f32.mrb[0].mxu0
    %v282 = vadd.f32 0.0, %v281
    %v283 = vpop.f32.mrb[0].mxu0
    %284 = vmatprep.mubr.f32.mxu0 0.0
    %285 = vmatmul.mubr.f32.gmra.mrb[0].mxu0 %v85
    %v286 = vpop.f32.mrb[0].mxu0
    %v287 = vadd.f32 0.0, %v286
    %v288 = vpop.f32.mrb[0].mxu0
    %289 = vmatprep.mubr.f32.mxu0 0.0
    %290 = vmatmul.mubr.f32.gmra.mrb[0].mxu0 %v86
    %v291 = vpop.f32.mrb[0].mxu0
    %v292 = vadd.f32 0.0, %v291
    %v293 = vpop.f32.mrb[0].mxu0
    %294 = vmatprep.mubr.f32.mxu0 0.0
    %295 = vmatmul.mubr.f32.gmra.mrb[0].mxu0 %v87
    %v296 = vpop.f32.mrb[0].mxu0
    %v297 = vadd.f32 0.0, %v296
    %v298 = vpop.f32.mrb[0].mxu0
    %299 = vmatprep.mubr.f32.mxu0 0.0
    %300 = vmatmul.mubr.f32.gmra.mrb[0].mxu0 %v88
    %v301 = vpop.f32.mrb[0].mxu0
    %v302 = vadd.f32 0.0, %v301
    %v303 = vpop.f32.mrb[0].mxu0
    %304 = vdwg.mxu0
    %v306 = vcombine.high %v197, %v197
    %v308 = vunpack.c.l.s4 1966171168
    %v309 = vunpack.c.0.s8 %v308
    %v310 = vlaneseq
    %v311 = vshrl.u32 %v310, 7
    %v312 = vsub.s32 %v309, %v311
    %v313 = vrot.slane %v197, %v312
    %v315 = vunpack.c.l.s4 1966171168
    %v316 = vunpack.c.0.s8 %v315
    %v317 = vlaneseq
    %v318 = vshrl.u32 %v317, 7
    %v319 = vsub.s32 %v316, %v318
    %v320 = vrot.slane %v306, %v319
    %v321 = vcombine.high %v313, %v313
    %v322 = vcombine.high %v320, %v320
    %v324 = vunpack.c.l.s4 1966171168
    %v325 = vunpack.c.0.s8 %v324
    %v326 = vlaneseq
    %v327 = vshrl.u32 %v326, 7
    %v328 = vsub.s32 %v325, %v327
    %v329 = vrot.slane %v313, %v328
    %v331 = vunpack.c.l.s4 1966171168
    %v332 = vunpack.c.0.s8 %v331
    %v333 = vlaneseq
    %v334 = vshrl.u32 %v333, 7
    %v335 = vsub.s32 %v332, %v334
    %v336 = vrot.slane %v320, %v335
    %v338 = vunpack.c.l.s4 1966171168
    %v339 = vunpack.c.0.s8 %v338
    %v340 = vlaneseq
    %v341 = vshrl.u32 %v340, 7
    %v342 = vsub.s32 %v339, %v341
    %v343 = vrot.slane %v321, %v342
    %v345 = vunpack.c.l.s4 1966171168
    %v346 = vunpack.c.0.s8 %v345
    %v347 = vlaneseq
    %v348 = vshrl.u32 %v347, 7
    %v349 = vsub.s32 %v346, %v348
    %v350 = vrot.slane %v322, %v349
    %v351 = vcombine.high %v329, %v329
    %v352 = vcombine.high %v336, %v336
    %v353 = vcombine.high %v343, %v343
    %v354 = vcombine.high %v350, %v350
    %v355 = vlaneseq
    %v356 = vshrl.u32 %v355, 7
    %v357 = vsub.s32 0, %v356
    %v358 = vrot.slane %v329, %v357
    %v359 = vlaneseq
    %v360 = vshrl.u32 %v359, 7
    %v361 = vsub.s32 0, %v360
    %v362 = vrot.slane %v343, %v361
    %v363 = vlaneseq
    %v364 = vshrl.u32 %v363, 7
    %v365 = vsub.s32 0, %v364
    %v366 = vrot.slane %v351, %v365
    %v367 = vlaneseq
    %v368 = vshrl.u32 %v367, 7
    %v369 = vsub.s32 0, %v368
    %v370 = vrot.slane %v353, %v369
    %v371 = vlaneseq
    %v372 = vshrl.u32 %v371, 7
    %v373 = vsub.s32 0, %v372
    %v374 = vrot.slane %v336, %v373
    %v375 = vlaneseq
    %v376 = vshrl.u32 %v375, 7
    %v377 = vsub.s32 0, %v376
    %v378 = vrot.slane %v350, %v377
    %v379 = vlaneseq
    %v380 = vshrl.u32 %v379, 7
    %v381 = vsub.s32 0, %v380
    %v382 = vrot.slane %v352, %v381
    %v383 = vlaneseq
    %v384 = vshrl.u32 %v383, 7
    %v385 = vsub.s32 0, %v384
    %v386 = vrot.slane %v354, %v385
    %v395 = vadd.f32 %v358, %v267
    %v396 = vadd.f32 %v362, %v272
    %v397 = vadd.f32 %v366, %v277
    %v398 = vadd.f32 %v370, %v282
    %v399 = vadd.f32 %v374, %v287
    %v400 = vadd.f32 %v378, %v292
    %v401 = vadd.f32 %v382, %v297
    %v402 = vadd.f32 %v386, %v302
    %v403 = vtanh.pop %v395
    %v404 = vtanh.pop %v396
    %v405 = vtanh.pop %v397
    %v406 = vtanh.pop %v398
    %v407 = vtanh.pop %v399
    %v408 = vtanh.pop %v400
    %v409 = vtanh.pop %v401
    %v410 = vtanh.pop %v402
    %v412 = vlaneseq
    %v413 = vshrl.u32 %v412, 7
    %v414 = vsub.s32 0, %v413
    %v415 = vrot.slane %v123, %v414
    %v417 = vmul.f32 %v403, %v415
    %v418 = vmul.f32 %v404, %v415
    %v419 = vmul.f32 %v405, %v415
    %v420 = vmul.f32 %v406, %v415
    %v421 = vmul.f32 %v407, %v415
    %v422 = vmul.f32 %v408, %v415
    %v423 = vmul.f32 %v409, %v415
    %v424 = vmul.f32 %v410, %v415
    %425 = vadd.xlane.f32.xlu0 %v417
    %v426 = vpop.xlane.xlu0 %425
    %427 = vadd.xlane.f32.xlu0 %v418
    %v428 = vpop.xlane.xlu0 %427
    %429 = vadd.xlane.f32.xlu0 %v419
    %v430 = vpop.xlane.xlu0 %429
    %431 = vadd.xlane.f32.xlu0 %v420
    %v432 = vpop.xlane.xlu0 %431
    %433 = vadd.xlane.f32.xlu0 %v421
    %v434 = vpop.xlane.xlu0 %433
    %435 = vadd.xlane.f32.xlu0 %v422
    %v436 = vpop.xlane.xlu0 %435
    %437 = vadd.xlane.f32.xlu0 %v423
    %v438 = vpop.xlane.xlu0 %437
    %439 = vadd.xlane.f32.xlu0 %v424
    %v440 = vpop.xlane.xlu0 %439
    %s441 = sld [smem:[#allocation2]]
    %v442 = vstv %s441
    %v443 = vadd.f32 %v426, %v442
    %v444 = vadd.f32 %v428, %v442
    %v445 = vadd.f32 %v430, %v442
    %v446 = vadd.f32 %v432, %v442
    %v447 = vadd.f32 %v434, %v442
    %v448 = vadd.f32 %v436, %v442
    %v449 = vadd.f32 %v438, %v442
    %v450 = vadd.f32 %v440, %v442
    %v459 = vlaneseq
    %v460 = vand.u32 %v459, 127
    %v461 = vlaneseq
    %v462 = vshrl.u32 %v461, 7
    %v463 = vsub.s32 %v460, %v462
    %v464 = vrot.slane %v443, %v463
    %v465 = vlaneseq
    %v466 = vshrl.u32 %v465, 7
    %v467 = vsub.s32 %v460, %v466
    %v468 = vrot.slane %v444, %v467
    %v469 = vlaneseq
    %v470 = vshrl.u32 %v469, 7
    %v471 = vsub.s32 %v460, %v470
    %v472 = vrot.slane %v445, %v471
    %v473 = vlaneseq
    %v474 = vshrl.u32 %v473, 7
    %v475 = vsub.s32 %v460, %v474
    %v476 = vrot.slane %v446, %v475
    %v477 = vlaneseq
    %v478 = vshrl.u32 %v477, 7
    %v479 = vsub.s32 %v460, %v478
    %v480 = vrot.slane %v447, %v479
    %v481 = vlaneseq
    %v482 = vshrl.u32 %v481, 7
    %v483 = vsub.s32 %v460, %v482
    %v484 = vrot.slane %v448, %v483
    %v485 = vlaneseq
    %v486 = vshrl.u32 %v485, 7
    %v487 = vsub.s32 %v460, %v486
    %v488 = vrot.slane %v449, %v487
    %v489 = vlaneseq
    %v490 = vshrl.u32 %v489, 7
    %v491 = vsub.s32 %v460, %v490
    %v492 = vrot.slane %v450, %v491
    %vm493 = vcmask 1041409
    %v494 = vsel %vm493, %v468, %v464
    %vm495 = vcmask 1042434
    %v496 = vsel %vm495, %v472, %v494
    %vm497 = vcmask 1043459
    %v498 = vsel %vm497, %v476, %v496
    %vm499 = vcmask 1044484
    %v500 = vsel %vm499, %v480, %v498
    %vm501 = vcmask 1045509
    %v502 = vsel %vm501, %v484, %v500
    %vm503 = vcmask 1046534
    %v504 = vsel %vm503, %v488, %v502
    %vm505 = vcmask 1047559
    %v506 = vsel %vm505, %v492, %v504
    %vm508 = vcmask 64512
    %v509 = vsel %vm508, %v506, -inf
    %510 = vmax.xlane.f32.xlu0 %v509
    %v511 = vpop.xlane.xlu0 %510
    %v513 = vlaneseq
    %v514 = vshrl.u32 %v513, 7
    %v515 = vsub.s32 0, %v514
    %v516 = vrot.slane %v511, %v515
    %v517 = vlaneseq
    %v518 = vshrl.u32 %v517, 7
    %v519 = vsub.s32 1, %v518
    %v520 = vrot.slane %v511, %v519
    %v521 = vlaneseq
    %v522 = vshrl.u32 %v521, 7
    %v523 = vsub.s32 2, %v522
    %v524 = vrot.slane %v511, %v523
    %v525 = vlaneseq
    %v526 = vshrl.u32 %v525, 7
    %v527 = vsub.s32 3, %v526
    %v528 = vrot.slane %v511, %v527
    %v529 = vlaneseq
    %v530 = vshrl.u32 %v529, 7
    %v531 = vsub.s32 4, %v530
    %v532 = vrot.slane %v511, %v531
    %v533 = vlaneseq
    %v534 = vshrl.u32 %v533, 7
    %v535 = vsub.s32 5, %v534
    %v536 = vrot.slane %v511, %v535
    %v537 = vlaneseq
    %v538 = vshrl.u32 %v537, 7
    %v539 = vsub.s32 6, %v538
    %v540 = vrot.slane %v511, %v539
    %v541 = vlaneseq
    %v542 = vshrl.u32 %v541, 7
    %v543 = vsub.s32 7, %v542
    %v544 = vrot.slane %v511, %v543
    %v553 = vsub.f32 %v443, %v516
    %v554 = vsub.f32 %v444, %v520
    %v555 = vsub.f32 %v445, %v524
    %v556 = vsub.f32 %v446, %v528
    %v557 = vsub.f32 %v447, %v532
    %v558 = vsub.f32 %v448, %v536
    %v559 = vsub.f32 %v449, %v540
    %v560 = vsub.f32 %v450, %v544
    %v561 = vmul.f32 %v553, 1.442695
    %v562 = vpow.pop %v561
    %v563 = vmul.f32 %v554, 1.442695
    %v564 = vpow.pop %v563
    %v565 = vmul.f32 %v555, 1.442695
    %v566 = vpow.pop %v565
    %v567 = vmul.f32 %v556, 1.442695
    %v568 = vpow.pop %v567
    %v569 = vmul.f32 %v557, 1.442695
    %v570 = vpow.pop %v569
    %v571 = vmul.f32 %v558, 1.442695
    %v572 = vpow.pop %v571
    %v573 = vmul.f32 %v559, 1.442695
    %v574 = vpow.pop %v573
    %v575 = vmul.f32 %v560, 1.442695
    %v576 = vpow.pop %v575
    %585 = vset.pattern.permute.xlu0 0
    %586 = vperm.xlu0 %585, %v562
    %v587 = vpop.permute.xlu0 %586
    %588 = vset.pattern.permute.xlu0 0
    %589 = vperm.xlu0 %588, %v564
    %v590 = vpop.permute.xlu0 %589
    %591 = vset.pattern.permute.xlu0 0
    %592 = vperm.xlu0 %591, %v566
    %v593 = vpop.permute.xlu0 %592
    %594 = vset.pattern.permute.xlu0 0
    %595 = vperm.xlu0 %594, %v568
    %v596 = vpop.permute.xlu0 %595
    %597 = vset.pattern.permute.xlu0 0
    %598 = vperm.xlu0 %597, %v570
    %v599 = vpop.permute.xlu0 %598
    %600 = vset.pattern.permute.xlu0 0
    %601 = vperm.xlu0 %600, %v572
    %v602 = vpop.permute.xlu0 %601
    %603 = vset.pattern.permute.xlu0 0
    %604 = vperm.xlu0 %603, %v574
    %v605 = vpop.permute.xlu0 %604
    %606 = vset.pattern.permute.xlu0 0
    %607 = vperm.xlu0 %606, %v576
    %v608 = vpop.permute.xlu0 %607
    %v609 = vlaneseq
    %v610 = vshrl.u32 %v609, 7
    %v611 = vsub.s32 %v460, %v610
    %v612 = vrot.slane %v587, %v611
    %v613 = vlaneseq
    %v614 = vshrl.u32 %v613, 7
    %v615 = vsub.s32 %v460, %v614
    %v616 = vrot.slane %v590, %v615
    %v617 = vlaneseq
    %v618 = vshrl.u32 %v617, 7
    %v619 = vsub.s32 %v460, %v618
    %v620 = vrot.slane %v593, %v619
    %v621 = vlaneseq
    %v622 = vshrl.u32 %v621, 7
    %v623 = vsub.s32 %v460, %v622
    %v624 = vrot.slane %v596, %v623
    %v625 = vlaneseq
    %v626 = vshrl.u32 %v625, 7
    %v627 = vsub.s32 %v460, %v626
    %v628 = vrot.slane %v599, %v627
    %v629 = vlaneseq
    %v630 = vshrl.u32 %v629, 7
    %v631 = vsub.s32 %v460, %v630
    %v632 = vrot.slane %v602, %v631
    %v633 = vlaneseq
    %v634 = vshrl.u32 %v633, 7
    %v635 = vsub.s32 %v460, %v634
    %v636 = vrot.slane %v605, %v635
    %v637 = vlaneseq
    %v638 = vshrl.u32 %v637, 7
    %v639 = vsub.s32 %v460, %v638
    %v640 = vrot.slane %v608, %v639
    %v641 = vsel %vm493, %v616, %v612
    %v642 = vsel %vm495, %v620, %v641
    %v643 = vsel %vm497, %v624, %v642
    %v644 = vsel %vm499, %v628, %v643
    %v645 = vsel %vm501, %v632, %v644
    %v646 = vsel %vm503, %v636, %v645
    %v647 = vsel %vm505, %v640, %v646
    %v649 = vsel %vm508, %v647, 0.0
    %650 = vadd.xlane.f32.xlu0 %v649
    %v651 = vpop.xlane.xlu0 %650
    %v652 = vrcp.pop %v651
    %v654 = vlaneseq
    %v655 = vshrl.u32 %v654, 7
    %v656 = vsub.s32 0, %v655
    %v657 = vrot.slane %v652, %v656
    %v658 = vlaneseq
    %v659 = vshrl.u32 %v658, 7
    %v660 = vsub.s32 1, %v659
    %v661 = vrot.slane %v652, %v660
    %v662 = vlaneseq
    %v663 = vshrl.u32 %v662, 7
    %v664 = vsub.s32 2, %v663
    %v665 = vrot.slane %v652, %v664
    %v666 = vlaneseq
    %v667 = vshrl.u32 %v666, 7
    %v668 = vsub.s32 3, %v667
    %v669 = vrot.slane %v652, %v668
    %v670 = vlaneseq
    %v671 = vshrl.u32 %v670, 7
    %v672 = vsub.s32 4, %v671
    %v673 = vrot.slane %v652, %v672
    %v674 = vlaneseq
    %v675 = vshrl.u32 %v674, 7
    %v676 = vsub.s32 5, %v675
    %v677 = vrot.slane %v652, %v676
    %v678 = vlaneseq
    %v679 = vshrl.u32 %v678, 7
    %v680 = vsub.s32 6, %v679
    %v681 = vrot.slane %v652, %v680
    %v682 = vlaneseq
    %v683 = vshrl.u32 %v682, 7
    %v684 = vsub.s32 7, %v683
    %v685 = vrot.slane %v652, %v684
    %v694 = vmul.f32 %v562, %v657
    %v695 = vmul.f32 %v564, %v661
    %v696 = vmul.f32 %v566, %v665
    %v697 = vmul.f32 %v568, %v669
    %v698 = vmul.f32 %v570, %v673
    %v699 = vmul.f32 %v572, %v677
    %v700 = vmul.f32 %v574, %v681
    %v701 = vmul.f32 %v576, %v685
    %703 = vset.pattern.permute.xlu0 0
    %704 = vperm.xlu0 %703, %v694
    %v705 = vpop.permute.xlu0 %704
    %v706 = vlaneseq
    %v707 = vshrl.u32 %v706, 7
    %v708 = vsub.s32 %v460, %v707
    %v709 = vrot.slane %v705, %v708
    %v710 = vsel %vm508, %v709, 0
    %712 = vmatprep.subr.mxu0 0.0
    %713 = vmatpush1.msra.mxu0 %v81
    %714 = vmatprep.subr.mxu0 0.0
    %715 = vmatpush1.msra.mxu0 0.0
    %716 = vmatprep.subr.mxu0 0.0
    %717 = vmatpush1.msra.mxu0 0.0
    %718 = vmatprep.subr.mxu0 0.0
    %719 = vmatpush1.msra.mxu0 0.0
    %720 = vmatprep.subr.mxu0 0.0
    %721 = vmatpush1.msra.mxu0 0.0
    %722 = vmatprep.subr.mxu0 0.0
    %723 = vmatpush1.msra.mxu0 0.0
    %724 = vmatprep.subr.mxu0 0.0
    %725 = vmatpush1.msra.mxu0 0.0
    %726 = vmatprep.subr.mxu0 0.0
    %727 = vmatpush1.msra.mxu0 0.0
    %728 = vmatprep.subr.mxu0 0.0
    %729 = vmatpush1.msra.mxu0 0.0
    %730 = vmatprep.subr.mxu0 0.0
    %731 = vmatpush1.msra.mxu0 0.0
    %732 = vmatprep.subr.mxu0 0.0
    %733 = vmatpush1.msra.mxu0 0.0
    %734 = vmatprep.subr.mxu0 0.0
    %735 = vmatpush1.msra.mxu0 0.0
    %736 = vmatprep.subr.mxu0 0.0
    %737 = vmatpush1.msra.mxu0 0.0
    %738 = vmatprep.subr.mxu0 0.0
    %739 = vmatpush1.msra.mxu0 0.0
    %740 = vmatprep.subr.mxu0 0.0
    %741 = vmatpush1.msra.mxu0 0.0
    %742 = vmatprep.subr.mxu0 0.0
    %743 = vmatpush1.msra.mxu0 0.0
    %744 = vmatprep.subr.mxu0 0.0
    %745 = vmatpush1.msra.mxu0 0.0
    %746 = vmatprep.subr.mxu0 0.0
    %747 = vmatpush1.msra.mxu0 0.0
    %748 = vmatprep.subr.mxu0 0.0
    %749 = vmatpush1.msra.mxu0 0.0
    %750 = vmatprep.subr.mxu0 0.0
    %751 = vmatpush1.msra.mxu0 0.0
    %752 = vmatprep.subr.mxu0 0.0
    %753 = vmatpush1.msra.mxu0 0.0
    %754 = vmatprep.subr.mxu0 0.0
    %755 = vmatpush1.msra.mxu0 0.0
    %756 = vmatprep.subr.mxu0 0.0
    %757 = vmatpush1.msra.mxu0 0.0
    %758 = vmatprep.subr.mxu0 0.0
    %759 = vmatpush1.msra.mxu0 0.0
    %760 = vmatprep.subr.mxu0 0.0
    %761 = vmatpush1.msra.mxu0 0.0
    %762 = vmatprep.subr.mxu0 0.0
    %763 = vmatpush1.msra.mxu0 0.0
    %764 = vmatprep.subr.mxu0 0.0
    %765 = vmatpush1.msra.mxu0 0.0
    %766 = vmatprep.subr.mxu0 0.0
    %767 = vmatpush1.msra.mxu0 0.0
    %768 = vmatprep.subr.mxu0 0.0
    %769 = vmatpush1.msra.mxu0 0.0
    %770 = vmatprep.subr.mxu0 0.0
    %771 = vmatpush1.msra.mxu0 0.0
    %772 = vmatprep.subr.mxu0 0.0
    %773 = vmatpush1.msra.mxu0 0.0
    %774 = vmatprep.subr.mxu0 0.0
    %775 = vmatpush1.msra.mxu0 0.0
    %776 = vmatprep.mubr.f32.mxu0 0.0
    %777 = vmatmul.mubr.f32.gmra.mrb[0].mxu0 %v710
    %v778 = vpop.f32.mrb[0].mxu0
    %v779 = vadd.f32 0.0, %v778
    %v780 = vpop.f32.mrb[0].mxu0
    %781 = vdwg.mxu0
    %783 = vset.pattern.permute.xlu0 0
    %784 = vperm.xlu0 %783, %v695
    %v785 = vpop.permute.xlu0 %784
    %v786 = vlaneseq
    %v787 = vshrl.u32 %v786, 7
    %v788 = vsub.s32 %v460, %v787
    %v789 = vrot.slane %v785, %v788
    %v790 = vsel %vm508, %v789, 0
    %792 = vmatprep.subr.mxu0 0.0
    %793 = vmatpush1.msra.mxu0 %v82
    %794 = vmatprep.subr.mxu0 0.0
    %795 = vmatpush1.msra.mxu0 0.0
    %796 = vmatprep.subr.mxu0 0.0
    %797 = vmatpush1.msra.mxu0 0.0
    %798 = vmatprep.subr.mxu0 0.0
    %799 = vmatpush1.msra.mxu0 0.0
    %800 = vmatprep.subr.mxu0 0.0
    %801 = vmatpush1.msra.mxu0 0.0
    %802 = vmatprep.subr.mxu0 0.0
    %803 = vmatpush1.msra.mxu0 0.0
    %804 = vmatprep.subr.mxu0 0.0
    %805 = vmatpush1.msra.mxu0 0.0
    %806 = vmatprep.subr.mxu0 0.0
    %807 = vmatpush1.msra.mxu0 0.0
    %808 = vmatprep.subr.mxu0 0.0
    %809 = vmatpush1.msra.mxu0 0.0
    %810 = vmatprep.subr.mxu0 0.0
    %811 = vmatpush1.msra.mxu0 0.0
    %812 = vmatprep.subr.mxu0 0.0
    %813 = vmatpush1.msra.mxu0 0.0
    %814 = vmatprep.subr.mxu0 0.0
    %815 = vmatpush1.msra.mxu0 0.0
    %816 = vmatprep.subr.mxu0 0.0
    %817 = vmatpush1.msra.mxu0 0.0
    %818 = vmatprep.subr.mxu0 0.0
    %819 = vmatpush1.msra.mxu0 0.0
    %820 = vmatprep.subr.mxu0 0.0
    %821 = vmatpush1.msra.mxu0 0.0
    %822 = vmatprep.subr.mxu0 0.0
    %823 = vmatpush1.msra.mxu0 0.0
    %824 = vmatprep.subr.mxu0 0.0
    %825 = vmatpush1.msra.mxu0 0.0
    %826 = vmatprep.subr.mxu0 0.0
    %827 = vmatpush1.msra.mxu0 0.0
    %828 = vmatprep.subr.mxu0 0.0
    %829 = vmatpush1.msra.mxu0 0.0
    %830 = vmatprep.subr.mxu0 0.0
    %831 = vmatpush1.msra.mxu0 0.0
    %832 = vmatprep.subr.mxu0 0.0
    %833 = vmatpush1.msra.mxu0 0.0
    %834 = vmatprep.subr.mxu0 0.0
    %835 = vmatpush1.msra.mxu0 0.0
    %836 = vmatprep.subr.mxu0 0.0
    %837 = vmatpush1.msra.mxu0 0.0
    %838 = vmatprep.subr.mxu0 0.0
    %839 = vmatpush1.msra.mxu0 0.0
    %840 = vmatprep.subr.mxu0 0.0
    %841 = vmatpush1.msra.mxu0 0.0
    %842 = vmatprep.subr.mxu0 0.0
    %843 = vmatpush1.msra.mxu0 0.0
    %844 = vmatprep.subr.mxu0 0.0
    %845 = vmatpush1.msra.mxu0 0.0
    %846 = vmatprep.subr.mxu0 0.0
    %847 = vmatpush1.msra.mxu0 0.0
    %848 = vmatprep.subr.mxu0 0.0
    %849 = vmatpush1.msra.mxu0 0.0
    %850 = vmatprep.subr.mxu0 0.0
    %851 = vmatpush1.msra.mxu0 0.0
    %852 = vmatprep.subr.mxu0 0.0
    %853 = vmatpush1.msra.mxu0 0.0
    %854 = vmatprep.subr.mxu0 0.0
    %855 = vmatpush1.msra.mxu0 0.0
    %856 = vmatprep.mubr.f32.mxu0 0.0
    %857 = vmatmul.mubr.f32.gmra.mrb[0].mxu0 %v790
    %v858 = vpop.f32.mrb[0].mxu0
    %v859 = vadd.f32 0.0, %v858
    %v860 = vpop.f32.mrb[0].mxu0
    %861 = vdwg.mxu0
    %863 = vset.pattern.permute.xlu0 0
    %864 = vperm.xlu0 %863, %v696
    %v865 = vpop.permute.xlu0 %864
    %v866 = vlaneseq
    %v867 = vshrl.u32 %v866, 7
    %v868 = vsub.s32 %v460, %v867
    %v869 = vrot.slane %v865, %v868
    %v870 = vsel %vm508, %v869, 0
    %872 = vmatprep.subr.mxu0 0.0
    %873 = vmatpush1.msra.mxu0 %v83
    %874 = vmatprep.subr.mxu0 0.0
    %875 = vmatpush1.msra.mxu0 0.0
    %876 = vmatprep.subr.mxu0 0.0
    %877 = vmatpush1.msra.mxu0 0.0
    %878 = vmatprep.subr.mxu0 0.0
    %879 = vmatpush1.msra.mxu0 0.0
    %880 = vmatprep.subr.mxu0 0.0
    %881 = vmatpush1.msra.mxu0 0.0
    %882 = vmatprep.subr.mxu0 0.0
    %883 = vmatpush1.msra.mxu0 0.0
    %884 = vmatprep.subr.mxu0 0.0
    %885 = vmatpush1.msra.mxu0 0.0
    %886 = vmatprep.subr.mxu0 0.0
    %887 = vmatpush1.msra.mxu0 0.0
    %888 = vmatprep.subr.mxu0 0.0
    %889 = vmatpush1.msra.mxu0 0.0
    %890 = vmatprep.subr.mxu0 0.0
    %891 = vmatpush1.msra.mxu0 0.0
    %892 = vmatprep.subr.mxu0 0.0
    %893 = vmatpush1.msra.mxu0 0.0
    %894 = vmatprep.subr.mxu0 0.0
    %895 = vmatpush1.msra.mxu0 0.0
    %896 = vmatprep.subr.mxu0 0.0
    %897 = vmatpush1.msra.mxu0 0.0
    %898 = vmatprep.subr.mxu0 0.0
    %899 = vmatpush1.msra.mxu0 0.0
    %900 = vmatprep.subr.mxu0 0.0
    %901 = vmatpush1.msra.mxu0 0.0
    %902 = vmatprep.subr.mxu0 0.0
    %903 = vmatpush1.msra.mxu0 0.0
    %904 = vmatprep.subr.mxu0 0.0
    %905 = vmatpush1.msra.mxu0 0.0
    %906 = vmatprep.subr.mxu0 0.0
    %907 = vmatpush1.msra.mxu0 0.0
    %908 = vmatprep.subr.mxu0 0.0
    %909 = vmatpush1.msra.mxu0 0.0
    %910 = vmatprep.subr.mxu0 0.0
    %911 = vmatpush1.msra.mxu0 0.0
    %912 = vmatprep.subr.mxu0 0.0
    %913 = vmatpush1.msra.mxu0 0.0
    %914 = vmatprep.subr.mxu0 0.0
    %915 = vmatpush1.msra.mxu0 0.0
    %916 = vmatprep.subr.mxu0 0.0
    %917 = vmatpush1.msra.mxu0 0.0
    %918 = vmatprep.subr.mxu0 0.0
    %919 = vmatpush1.msra.mxu0 0.0
    %920 = vmatprep.subr.mxu0 0.0
    %921 = vmatpush1.msra.mxu0 0.0
    %922 = vmatprep.subr.mxu0 0.0
    %923 = vmatpush1.msra.mxu0 0.0
    %924 = vmatprep.subr.mxu0 0.0
    %925 = vmatpush1.msra.mxu0 0.0
    %926 = vmatprep.subr.mxu0 0.0
    %927 = vmatpush1.msra.mxu0 0.0
    %928 = vmatprep.subr.mxu0 0.0
    %929 = vmatpush1.msra.mxu0 0.0
    %930 = vmatprep.subr.mxu0 0.0
    %931 = vmatpush1.msra.mxu0 0.0
    %932 = vmatprep.subr.mxu0 0.0
    %933 = vmatpush1.msra.mxu0 0.0
    %934 = vmatprep.subr.mxu0 0.0
    %935 = vmatpush1.msra.mxu0 0.0
    %936 = vmatprep.mubr.f32.mxu0 0.0
    %937 = vmatmul.mubr.f32.gmra.mrb[0].mxu0 %v870
    %v938 = vpop.f32.mrb[0].mxu0
    %v939 = vadd.f32 0.0, %v938
    %v940 = vpop.f32.mrb[0].mxu0
    %941 = vdwg.mxu0
    %943 = vset.pattern.permute.xlu0 0
    %944 = vperm.xlu0 %943, %v697
    %v945 = vpop.permute.xlu0 %944
    %v946 = vlaneseq
    %v947 = vshrl.u32 %v946, 7
    %v948 = vsub.s32 %v460, %v947
    %v949 = vrot.slane %v945, %v948
    %v950 = vsel %vm508, %v949, 0
    %952 = vmatprep.subr.mxu0 0.0
    %953 = vmatpush1.msra.mxu0 %v84
    %954 = vmatprep.subr.mxu0 0.0
    %955 = vmatpush1.msra.mxu0 0.0
    %956 = vmatprep.subr.mxu0 0.0
    %957 = vmatpush1.msra.mxu0 0.0
    %958 = vmatprep.subr.mxu0 0.0
    %959 = vmatpush1.msra.mxu0 0.0
    %960 = vmatprep.subr.mxu0 0.0
    %961 = vmatpush1.msra.mxu0 0.0
    %962 = vmatprep.subr.mxu0 0.0
    %963 = vmatpush1.msra.mxu0 0.0
    %964 = vmatprep.subr.mxu0 0.0
    %965 = vmatpush1.msra.mxu0 0.0
    %966 = vmatprep.subr.mxu0 0.0
    %967 = vmatpush1.msra.mxu0 0.0
    %968 = vmatprep.subr.mxu0 0.0
    %969 = vmatpush1.msra.mxu0 0.0
    %970 = vmatprep.subr.mxu0 0.0
    %971 = vmatpush1.msra.mxu0 0.0
    %972 = vmatprep.subr.mxu0 0.0
    %973 = vmatpush1.msra.mxu0 0.0
    %974 = vmatprep.subr.mxu0 0.0
    %975 = vmatpush1.msra.mxu0 0.0
    %976 = vmatprep.subr.mxu0 0.0
    %977 = vmatpush1.msra.mxu0 0.0
    %978 = vmatprep.subr.mxu0 0.0
    %979 = vmatpush1.msra.mxu0 0.0
    %980 = vmatprep.subr.mxu0 0.0
    %981 = vmatpush1.msra.mxu0 0.0
    %982 = vmatprep.subr.mxu0 0.0
    %983 = vmatpush1.msra.mxu0 0.0
    %984 = vmatprep.subr.mxu0 0.0
    %985 = vmatpush1.msra.mxu0 0.0
    %986 = vmatprep.subr.mxu0 0.0
    %987 = vmatpush1.msra.mxu0 0.0
    %988 = vmatprep.subr.mxu0 0.0
    %989 = vmatpush1.msra.mxu0 0.0
    %990 = vmatprep.subr.mxu0 0.0
    %991 = vmatpush1.msra.mxu0 0.0
    %992 = vmatprep.subr.mxu0 0.0
    %993 = vmatpush1.msra.mxu0 0.0
    %994 = vmatprep.subr.mxu0 0.0
    %995 = vmatpush1.msra.mxu0 0.0
    %996 = vmatprep.subr.mxu0 0.0
    %997 = vmatpush1.msra.mxu0 0.0
    %998 = vmatprep.subr.mxu0 0.0
    %999 = vmatpush1.msra.mxu0 0.0
    %1000 = vmatprep.subr.mxu0 0.0
    %1001 = vmatpush1.msra.mxu0 0.0
    %1002 = vmatprep.subr.mxu0 0.0
    %1003 = vmatpush1.msra.mxu0 0.0
    %1004 = vmatprep.subr.mxu0 0.0
    %1005 = vmatpush1.msra.mxu0 0.0
    %1006 = vmatprep.subr.mxu0 0.0
    %1007 = vmatpush1.msra.mxu0 0.0
    %1008 = vmatprep.subr.mxu0 0.0
    %1009 = vmatpush1.msra.mxu0 0.0
    %1010 = vmatprep.subr.mxu0 0.0
    %1011 = vmatpush1.msra.mxu0 0.0
    %1012 = vmatprep.subr.mxu0 0.0
    %1013 = vmatpush1.msra.mxu0 0.0
    %1014 = vmatprep.subr.mxu0 0.0
    %1015 = vmatpush1.msra.mxu0 0.0
    %1016 = vmatprep.mubr.f32.mxu0 0.0
    %1017 = vmatmul.mubr.f32.gmra.mrb[0].mxu0 %v950
    %v1018 = vpop.f32.mrb[0].mxu0
    %v1019 = vadd.f32 0.0, %v1018
    %v1020 = vpop.f32.mrb[0].mxu0
    %1021 = vdwg.mxu0
    %1023 = vset.pattern.permute.xlu0 0
    %1024 = vperm.xlu0 %1023, %v698
    %v1025 = vpop.permute.xlu0 %1024
    %v1026 = vlaneseq
    %v1027 = vshrl.u32 %v1026, 7
    %v1028 = vsub.s32 %v460, %v1027
    %v1029 = vrot.slane %v1025, %v1028
    %v1030 = vsel %vm508, %v1029, 0
    %1032 = vmatprep.subr.mxu0 0.0
    %1033 = vmatpush1.msra.mxu0 %v85
    %1034 = vmatprep.subr.mxu0 0.0
    %1035 = vmatpush1.msra.mxu0 0.0
    %1036 = vmatprep.subr.mxu0 0.0
    %1037 = vmatpush1.msra.mxu0 0.0
    %1038 = vmatprep.subr.mxu0 0.0
    %1039 = vmatpush1.msra.mxu0 0.0
    %1040 = vmatprep.subr.mxu0 0.0
    %1041 = vmatpush1.msra.mxu0 0.0
    %1042 = vmatprep.subr.mxu0 0.0
    %1043 = vmatpush1.msra.mxu0 0.0
    %1044 = vmatprep.subr.mxu0 0.0
    %1045 = vmatpush1.msra.mxu0 0.0
    %1046 = vmatprep.subr.mxu0 0.0
    %1047 = vmatpush1.msra.mxu0 0.0
    %1048 = vmatprep.subr.mxu0 0.0
    %1049 = vmatpush1.msra.mxu0 0.0
    %1050 = vmatprep.subr.mxu0 0.0
    %1051 = vmatpush1.msra.mxu0 0.0
    %1052 = vmatprep.subr.mxu0 0.0
    %1053 = vmatpush1.msra.mxu0 0.0
    %1054 = vmatprep.subr.mxu0 0.0
    %1055 = vmatpush1.msra.mxu0 0.0
    %1056 = vmatprep.subr.mxu0 0.0
    %1057 = vmatpush1.msra.mxu0 0.0
    %1058 = vmatprep.subr.mxu0 0.0
    %1059 = vmatpush1.msra.mxu0 0.0
    %1060 = vmatprep.subr.mxu0 0.0
    %1061 = vmatpush1.msra.mxu0 0.0
    %1062 = vmatprep.subr.mxu0 0.0
    %1063 = vmatpush1.msra.mxu0 0.0
    %1064 = vmatprep.subr.mxu0 0.0
    %1065 = vmatpush1.msra.mxu0 0.0
    %1066 = vmatprep.subr.mxu0 0.0
    %1067 = vmatpush1.msra.mxu0 0.0
    %1068 = vmatprep.subr.mxu0 0.0
    %1069 = vmatpush1.msra.mxu0 0.0
    %1070 = vmatprep.subr.mxu0 0.0
    %1071 = vmatpush1.msra.mxu0 0.0
    %1072 = vmatprep.subr.mxu0 0.0
    %1073 = vmatpush1.msra.mxu0 0.0
    %1074 = vmatprep.subr.mxu0 0.0
    %1075 = vmatpush1.msra.mxu0 0.0
    %1076 = vmatprep.subr.mxu0 0.0
    %1077 = vmatpush1.msra.mxu0 0.0
    %1078 = vmatprep.subr.mxu0 0.0
    %1079 = vmatpush1.msra.mxu0 0.0
    %1080 = vmatprep.subr.mxu0 0.0
    %1081 = vmatpush1.msra.mxu0 0.0
    %1082 = vmatprep.subr.mxu0 0.0
    %1083 = vmatpush1.msra.mxu0 0.0
    %1084 = vmatprep.subr.mxu0 0.0
    %1085 = vmatpush1.msra.mxu0 0.0
    %1086 = vmatprep.subr.mxu0 0.0
    %1087 = vmatpush1.msra.mxu0 0.0
    %1088 = vmatprep.subr.mxu0 0.0
    %1089 = vmatpush1.msra.mxu0 0.0
    %1090 = vmatprep.subr.mxu0 0.0
    %1091 = vmatpush1.msra.mxu0 0.0
    %1092 = vmatprep.subr.mxu0 0.0
    %1093 = vmatpush1.msra.mxu0 0.0
    %1094 = vmatprep.subr.mxu0 0.0
    %1095 = vmatpush1.msra.mxu0 0.0
    %1096 = vmatprep.mubr.f32.mxu0 0.0
    %1097 = vmatmul.mubr.f32.gmra.mrb[0].mxu0 %v1030
    %v1098 = vpop.f32.mrb[0].mxu0
    %v1099 = vadd.f32 0.0, %v1098
    %v1100 = vpop.f32.mrb[0].mxu0
    %1101 = vdwg.mxu0
    %1103 = vset.pattern.permute.xlu0 0
    %1104 = vperm.xlu0 %1103, %v699
    %v1105 = vpop.permute.xlu0 %1104
    %v1106 = vlaneseq
    %v1107 = vshrl.u32 %v1106, 7
    %v1108 = vsub.s32 %v460, %v1107
    %v1109 = vrot.slane %v1105, %v1108
    %v1110 = vsel %vm508, %v1109, 0
    %1112 = vmatprep.subr.mxu0 0.0
    %1113 = vmatpush1.msra.mxu0 %v86
    %1114 = vmatprep.subr.mxu0 0.0
    %1115 = vmatpush1.msra.mxu0 0.0
    %1116 = vmatprep.subr.mxu0 0.0
    %1117 = vmatpush1.msra.mxu0 0.0
    %1118 = vmatprep.subr.mxu0 0.0
    %1119 = vmatpush1.msra.mxu0 0.0
    %1120 = vmatprep.subr.mxu0 0.0
    %1121 = vmatpush1.msra.mxu0 0.0
    %1122 = vmatprep.subr.mxu0 0.0
    %1123 = vmatpush1.msra.mxu0 0.0
    %1124 = vmatprep.subr.mxu0 0.0
    %1125 = vmatpush1.msra.mxu0 0.0
    %1126 = vmatprep.subr.mxu0 0.0
    %1127 = vmatpush1.msra.mxu0 0.0
    %1128 = vmatprep.subr.mxu0 0.0
    %1129 = vmatpush1.msra.mxu0 0.0
    %1130 = vmatprep.subr.mxu0 0.0
    %1131 = vmatpush1.msra.mxu0 0.0
    %1132 = vmatprep.subr.mxu0 0.0
    %1133 = vmatpush1.msra.mxu0 0.0
    %1134 = vmatprep.subr.mxu0 0.0
    %1135 = vmatpush1.msra.mxu0 0.0
    %1136 = vmatprep.subr.mxu0 0.0
    %1137 = vmatpush1.msra.mxu0 0.0
    %1138 = vmatprep.subr.mxu0 0.0
    %1139 = vmatpush1.msra.mxu0 0.0
    %1140 = vmatprep.subr.mxu0 0.0
    %1141 = vmatpush1.msra.mxu0 0.0
    %1142 = vmatprep.subr.mxu0 0.0
    %1143 = vmatpush1.msra.mxu0 0.0
    %1144 = vmatprep.subr.mxu0 0.0
    %1145 = vmatpush1.msra.mxu0 0.0
    %1146 = vmatprep.subr.mxu0 0.0
    %1147 = vmatpush1.msra.mxu0 0.0
    %1148 = vmatprep.subr.mxu0 0.0
    %1149 = vmatpush1.msra.mxu0 0.0
    %1150 = vmatprep.subr.mxu0 0.0
    %1151 = vmatpush1.msra.mxu0 0.0
    %1152 = vmatprep.subr.mxu0 0.0
    %1153 = vmatpush1.msra.mxu0 0.0
    %1154 = vmatprep.subr.mxu0 0.0
    %1155 = vmatpush1.msra.mxu0 0.0
    %1156 = vmatprep.subr.mxu0 0.0
    %1157 = vmatpush1.msra.mxu0 0.0
    %1158 = vmatprep.subr.mxu0 0.0
    %1159 = vmatpush1.msra.mxu0 0.0
    %1160 = vmatprep.subr.mxu0 0.0
    %1161 = vmatpush1.msra.mxu0 0.0
    %1162 = vmatprep.subr.mxu0 0.0
    %1163 = vmatpush1.msra.mxu0 0.0
    %1164 = vmatprep.subr.mxu0 0.0
    %1165 = vmatpush1.msra.mxu0 0.0
    %1166 = vmatprep.subr.mxu0 0.0
    %1167 = vmatpush1.msra.mxu0 0.0
    %1168 = vmatprep.subr.mxu0 0.0
    %1169 = vmatpush1.msra.mxu0 0.0
    %1170 = vmatprep.subr.mxu0 0.0
    %1171 = vmatpush1.msra.mxu0 0.0
    %1172 = vmatprep.subr.mxu0 0.0
    %1173 = vmatpush1.msra.mxu0 0.0
    %1174 = vmatprep.subr.mxu0 0.0
    %1175 = vmatpush1.msra.mxu0 0.0
    %1176 = vmatprep.mubr.f32.mxu0 0.0
    %1177 = vmatmul.mubr.f32.gmra.mrb[0].mxu0 %v1110
    %v1178 = vpop.f32.mrb[0].mxu0
    %v1179 = vadd.f32 0.0, %v1178
    %v1180 = vpop.f32.mrb[0].mxu0
    %1181 = vdwg.mxu0
    %1183 = vset.pattern.permute.xlu0 0
    %1184 = vperm.xlu0 %1183, %v700
    %v1185 = vpop.permute.xlu0 %1184
    %v1186 = vlaneseq
    %v1187 = vshrl.u32 %v1186, 7
    %v1188 = vsub.s32 %v460, %v1187
    %v1189 = vrot.slane %v1185, %v1188
    %v1190 = vsel %vm508, %v1189, 0
    %1192 = vmatprep.subr.mxu0 0.0
    %1193 = vmatpush1.msra.mxu0 %v87
    %1194 = vmatprep.subr.mxu0 0.0
    %1195 = vmatpush1.msra.mxu0 0.0
    %1196 = vmatprep.subr.mxu0 0.0
    %1197 = vmatpush1.msra.mxu0 0.0
    %1198 = vmatprep.subr.mxu0 0.0
    %1199 = vmatpush1.msra.mxu0 0.0
    %1200 = vmatprep.subr.mxu0 0.0
    %1201 = vmatpush1.msra.mxu0 0.0
    %1202 = vmatprep.subr.mxu0 0.0
    %1203 = vmatpush1.msra.mxu0 0.0
    %1204 = vmatprep.subr.mxu0 0.0
    %1205 = vmatpush1.msra.mxu0 0.0
    %1206 = vmatprep.subr.mxu0 0.0
    %1207 = vmatpush1.msra.mxu0 0.0
    %1208 = vmatprep.subr.mxu0 0.0
    %1209 = vmatpush1.msra.mxu0 0.0
    %1210 = vmatprep.subr.mxu0 0.0
    %1211 = vmatpush1.msra.mxu0 0.0
    %1212 = vmatprep.subr.mxu0 0.0
    %1213 = vmatpush1.msra.mxu0 0.0
    %1214 = vmatprep.subr.mxu0 0.0
    %1215 = vmatpush1.msra.mxu0 0.0
    %1216 = vmatprep.subr.mxu0 0.0
    %1217 = vmatpush1.msra.mxu0 0.0
    %1218 = vmatprep.subr.mxu0 0.0
    %1219 = vmatpush1.msra.mxu0 0.0
    %1220 = vmatprep.subr.mxu0 0.0
    %1221 = vmatpush1.msra.mxu0 0.0
    %1222 = vmatprep.subr.mxu0 0.0
    %1223 = vmatpush1.msra.mxu0 0.0
    %1224 = vmatprep.subr.mxu0 0.0
    %1225 = vmatpush1.msra.mxu0 0.0
    %1226 = vmatprep.subr.mxu0 0.0
    %1227 = vmatpush1.msra.mxu0 0.0
    %1228 = vmatprep.subr.mxu0 0.0
    %1229 = vmatpush1.msra.mxu0 0.0
    %1230 = vmatprep.subr.mxu0 0.0
    %1231 = vmatpush1.msra.mxu0 0.0
    %1232 = vmatprep.subr.mxu0 0.0
    %1233 = vmatpush1.msra.mxu0 0.0
    %1234 = vmatprep.subr.mxu0 0.0
    %1235 = vmatpush1.msra.mxu0 0.0
    %1236 = vmatprep.subr.mxu0 0.0
    %1237 = vmatpush1.msra.mxu0 0.0
    %1238 = vmatprep.subr.mxu0 0.0
    %1239 = vmatpush1.msra.mxu0 0.0
    %1240 = vmatprep.subr.mxu0 0.0
    %1241 = vmatpush1.msra.mxu0 0.0
    %1242 = vmatprep.subr.mxu0 0.0
    %1243 = vmatpush1.msra.mxu0 0.0
    %1244 = vmatprep.subr.mxu0 0.0
    %1245 = vmatpush1.msra.mxu0 0.0
    %1246 = vmatprep.subr.mxu0 0.0
    %1247 = vmatpush1.msra.mxu0 0.0
    %1248 = vmatprep.subr.mxu0 0.0
    %1249 = vmatpush1.msra.mxu0 0.0
    %1250 = vmatprep.subr.mxu0 0.0
    %1251 = vmatpush1.msra.mxu0 0.0
    %1252 = vmatprep.subr.mxu0 0.0
    %1253 = vmatpush1.msra.mxu0 0.0
    %1254 = vmatprep.subr.mxu0 0.0
    %1255 = vmatpush1.msra.mxu0 0.0
    %1256 = vmatprep.mubr.f32.mxu0 0.0
    %1257 = vmatmul.mubr.f32.gmra.mrb[0].mxu0 %v1190
    %v1258 = vpop.f32.mrb[0].mxu0
    %v1259 = vadd.f32 0.0, %v1258
    %v1260 = vpop.f32.mrb[0].mxu0
    %1261 = vdwg.mxu0
    %1263 = vset.pattern.permute.xlu0 0
    %1264 = vperm.xlu0 %1263, %v701
    %v1265 = vpop.permute.xlu0 %1264
    %v1266 = vlaneseq
    %v1267 = vshrl.u32 %v1266, 7
    %v1268 = vsub.s32 %v460, %v1267
    %v1269 = vrot.slane %v1265, %v1268
    %v1270 = vsel %vm508, %v1269, 0
    %1272 = vmatprep.subr.mxu0 0.0
    %1273 = vmatpush1.msra.mxu0 %v88
    %1274 = vmatprep.subr.mxu0 0.0
    %1275 = vmatpush1.msra.mxu0 0.0
    %1276 = vmatprep.subr.mxu0 0.0
    %1277 = vmatpush1.msra.mxu0 0.0
    %1278 = vmatprep.subr.mxu0 0.0
    %1279 = vmatpush1.msra.mxu0 0.0
    %1280 = vmatprep.subr.mxu0 0.0
    %1281 = vmatpush1.msra.mxu0 0.0
    %1282 = vmatprep.subr.mxu0 0.0
    %1283 = vmatpush1.msra.mxu0 0.0
    %1284 = vmatprep.subr.mxu0 0.0
    %1285 = vmatpush1.msra.mxu0 0.0
    %1286 = vmatprep.subr.mxu0 0.0
    %1287 = vmatpush1.msra.mxu0 0.0
    %1288 = vmatprep.subr.mxu0 0.0
    %1289 = vmatpush1.msra.mxu0 0.0
    %1290 = vmatprep.subr.mxu0 0.0
    %1291 = vmatpush1.msra.mxu0 0.0
    %1292 = vmatprep.subr.mxu0 0.0
    %1293 = vmatpush1.msra.mxu0 0.0
    %1294 = vmatprep.subr.mxu0 0.0
    %1295 = vmatpush1.msra.mxu0 0.0
    %1296 = vmatprep.subr.mxu0 0.0
    %1297 = vmatpush1.msra.mxu0 0.0
    %1298 = vmatprep.subr.mxu0 0.0
    %1299 = vmatpush1.msra.mxu0 0.0
    %1300 = vmatprep.subr.mxu0 0.0
    %1301 = vmatpush1.msra.mxu0 0.0
    %1302 = vmatprep.subr.mxu0 0.0
    %1303 = vmatpush1.msra.mxu0 0.0
    %1304 = vmatprep.subr.mxu0 0.0
    %1305 = vmatpush1.msra.mxu0 0.0
    %1306 = vmatprep.subr.mxu0 0.0
    %1307 = vmatpush1.msra.mxu0 0.0
    %1308 = vmatprep.subr.mxu0 0.0
    %1309 = vmatpush1.msra.mxu0 0.0
    %1310 = vmatprep.subr.mxu0 0.0
    %1311 = vmatpush1.msra.mxu0 0.0
    %1312 = vmatprep.subr.mxu0 0.0
    %1313 = vmatpush1.msra.mxu0 0.0
    %1314 = vmatprep.subr.mxu0 0.0
    %1315 = vmatpush1.msra.mxu0 0.0
    %1316 = vmatprep.subr.mxu0 0.0
    %1317 = vmatpush1.msra.mxu0 0.0
    %1318 = vmatprep.subr.mxu0 0.0
    %1319 = vmatpush1.msra.mxu0 0.0
    %1320 = vmatprep.subr.mxu0 0.0
    %1321 = vmatpush1.msra.mxu0 0.0
    %1322 = vmatprep.subr.mxu0 0.0
    %1323 = vmatpush1.msra.mxu0 0.0
    %1324 = vmatprep.subr.mxu0 0.0
    %1325 = vmatpush1.msra.mxu0 0.0
    %1326 = vmatprep.subr.mxu0 0.0
    %1327 = vmatpush1.msra.mxu0 0.0
    %1328 = vmatprep.subr.mxu0 0.0
    %1329 = vmatpush1.msra.mxu0 0.0
    %1330 = vmatprep.subr.mxu0 0.0
    %1331 = vmatpush1.msra.mxu0 0.0
    %1332 = vmatprep.subr.mxu0 0.0
    %1333 = vmatpush1.msra.mxu0 0.0
    %1334 = vmatprep.subr.mxu0 0.0
    %1335 = vmatpush1.msra.mxu0 0.0
    %1336 = vmatprep.mubr.f32.mxu0 0.0
    %1337 = vmatmul.mubr.f32.gmra.mrb[0].mxu0 %v1270
    %v1338 = vpop.f32.mrb[0].mxu0
    %v1339 = vadd.f32 0.0, %v1338
    %v1340 = vpop.f32.mrb[0].mxu0
    %1341 = vdwg.mxu0
    %v1350 = vrot.slane %v859, 7
    %v1351 = vsel %vm493, %v1350, %v779
    %v1352 = vrot.slane %v939, 6
    %v1353 = vsel %vm495, %v1352, %v1351
    %v1354 = vrot.slane %v1019, 5
    %v1355 = vsel %vm497, %v1354, %v1353
    %v1356 = vrot.slane %v1099, 4
    %v1357 = vsel %vm499, %v1356, %v1355
    %v1358 = vrot.slane %v1179, 3
    %v1359 = vsel %vm501, %v1358, %v1357
    %v1360 = vrot.slane %v1259, 2
    %v1361 = vsel %vm503, %v1360, %v1359
    %v1362 = vrot.slane %v1339, 1
    %v1363 = vsel %vm505, %v1362, %v1361
    %1365 = vst [vmem:[#allocation11] sm:$0xff] %v1363
    // Predicated region
    $region46: #{tpu_custom_call.1} parent=1 // pred_check
      _
    $region47: #{tpu_custom_call.1} parent=1 // pred_check_branch
      %1367 = sbr.rel (0) target = $region49
    $region48: #{tpu_custom_call.1} parent=1 // pred_region
      %s1369 = ssub.s32 128, 128
      %1370 = vsyncadd [#allocation5], %s1369
      %s1372 = sshll.u32 [#allocation11], 4
      %s1373 = int_to_ptr.vmem [resolvable:$true] %s1372
      %1375 = dma.vmem_to_hbm [thread:$0]  %s1373, 128, %s7, [#allocation5]
    $region49: #{tpu_custom_call.1} parent=1 // pred_fallthru
      _
    // Predicated region
    $region50: #{tpu_custom_call.1} parent=1 // pred_check
      _
    $region51: #{tpu_custom_call.1} parent=1 // pred_check_branch
      %1377 = sbr.rel (0) target = $region53
    $region52: #{tpu_custom_call.1} parent=1 // pred_region
      %1378 = dma.done [#allocation5], 128
    $region53: #{tpu_custom_call.1} parent=1 // pred_fallthru
      _
    %1379 = vsyncpa [#allocation4], 1
    %1380 = vsyncpa [#allocation7], 1
    %1381 = vsyncpa [#allocation10], 1
    %1382 = vsyncpa [#allocation5], 1

</llo_original>
